<compile_context>
chip_gen: v7x
topology: tpu7x:2x2x1
jax: 0.10.0
libtpu: 0.0.40
codegen_flags: <defaults>
</compile_context>

<pallas_src>
import functools

import jax
import jax.numpy as jnp
from jax.experimental import pallas as pl
from jax.experimental.pallas import tpu as pltpu

LANES = 512  # lane-dense slab width (multiple of 128)


def _tpu_config():
    """Generation-aware VMEM limit and fused-path cutoff."""
    vmem_bytes = 64 * 1024 * 1024            # conservative fallback (v7x-safe)
    try:
        vmem_bytes = int(pltpu.get_tpu_info().vmem_capacity_bytes)
    except Exception:
        pass
    # ~5/8 of physical VMEM, capped: ~40 MiB on v7x (64 MiB/TC), ~80 MiB on
    # v5e/v6e (128 MiB). Leaves headroom for compiler scratch.
    vmem_limit = max(min(vmem_bytes * 5 // 8, 96 * 1024 * 1024), 24 * 1024 * 1024)
    # Fused single-pass path keeps the whole tensor resident; budget ~4x f32
    # temporaries + double-buffered in/out blocks -> limit/40 elements.
    # TODO(synk): chunk the fused reductions with a fori_loop over the
    # resident ref to push this cutoff higher (temporaries stay chunk-sized).
    fused_max = max(vmem_limit // 40, 256 * 1024)
    return vmem_limit, fused_max


_VMEM_LIMIT, _FUSED_MAX_ELEMS = _tpu_config()


# ---------------------------------------------------------------------------
# Fused single-pass kernel (whole tensor resident in VMEM) -- weight-sized path
# ---------------------------------------------------------------------------
def _sum_all(v):
    """(R, L) f32 -> (1, 1) f32: VPU adds down sublanes, one lane reduce."""
    return jnp.sum(jnp.sum(v, axis=0, keepdims=True), axis=1, keepdims=True)


def _fused_kernel(params_ref, x_ref, o_ref, *, levels, valid_count, needs_mask):
    # params_ref (SMEM f32[2]): [1/alpha, alpha/levels]
    inv_alpha = params_ref[0]
    alpha_over_levels = params_ref[1]

    x = x_ref[...].astype(jnp.float32)
    rows, lanes = x.shape

    if needs_mask:
        # Ragged tail: build the mask once and reuse it (padded region holds
        # explicit zeros from jnp.pad, so a multiply-mask is safe).
        idx = (jax.lax.broadcasted_iota(jnp.int32, (rows, lanes), 0) * lanes
               + jax.lax.broadcasted_iota(jnp.int32, (rows, lanes), 1))
        maskf = (idx < valid_count).astype(jnp.float32)
        xv = x * maskf
    else:
        xv = x

    # mean / unbiased std, stable centered two-pass on resident data.
    mean = _sum_all(xv) * (1.0 / valid_count)                       # (1, 1)
    if needs_mask:
        centered = xv - mean * maskf      # padded entries stay exactly 0
    else:
        centered = xv - mean
    # valid_count == 1 -> NaN, matching torch.std(ddof=1).
    inv_nm1 = (1.0 / (valid_count - 1)) if valid_count > 1 else float("nan")
    var = _sum_all(centered * centered) * inv_nm1                   # (1, 1)
    inv_std = jax.lax.rsqrt(var)                                    # (1, 1)

    # Folded quantize: x*scale + offset -> clip(+/-levels) -> round -> *step.
    scale = inv_std * (inv_alpha * levels)                          # (1, 1)
    offset = -(mean * scale)                                        # (1, 1)
    d = jnp.clip(x * scale + offset, -levels, levels)
    o_ref[...] = (jnp.round(d) * alpha_over_levels).astype(o_ref.dtype)


# ---------------------------------------------------------------------------
# Two-pass path kernels (large tensors)
# ---------------------------------------------------------------------------
def _reduce_kernel(x_ref, sum_ref, sq_ref, *, last_idx, valid_rows_last):
    """Per-block partial per-lane sums of x and x*x (one output slot / block).

    Only the last block can be partial; rows past the (LANES-padded) array
    bound contain garbage in that edge block and are zeroed before summing.
    """
    x = x_ref[...].astype(jnp.float32)

    def accum(xm):
        sum_ref[...] = jnp.sum(xm, axis=0, keepdims=True)
        sq_ref[...] = jnp.sum(xm * xm, axis=0, keepdims=True)

    if valid_rows_last is None:              # static: no ragged last block
        accum(x)
    else:
        i = pl.program_id(0)

        @pl.when(i != last_idx)
        def _full():
            accum(x)

        @pl.when(i == last_idx)
        def _partial():
            row = jax.lax.broadcasted_iota(jnp.int32, x.shape, 0)
            accum(jnp.where(row < valid_rows_last, x, 0.0))


def _quant_kernel(scalars_ref, x_ref, o_ref, *, levels):
    """Normalize + uniform-quantize one (block_rows, LANES) tile.

    scalars_ref (SMEM f32[3]): [scale, offset, alpha/levels], pre-folded so
    the per-element chain is mul/add/clip/round/mul.
    """
    scale = scalars_ref[0]
    offset = scalars_ref[1]
    alpha_over_levels = scalars_ref[2]

    x = x_ref[...].astype(jnp.float32)
    d = jnp.clip(x * scale + offset, -levels, levels)
    o_ref[...] = (jnp.round(d) * alpha_over_levels).astype(o_ref.dtype)


# ---------------------------------------------------------------------------
# Wrappers (all of this traces into a single jitted program)
# ---------------------------------------------------------------------------
def _fused_forward(flat, alpha_f, levels, n, orig_shape, orig_dtype):
    rows = -(-n // LANES)
    padded = rows * LANES
    if padded != n:
        flat = jnp.pad(flat, (0, padded - n))   # small tensor: cheap, jit-fused
    x2d = flat.reshape(rows, LANES)

    params = jnp.stack([1.0 / alpha_f, alpha_f / levels]).astype(jnp.float32)

    kernel = functools.partial(_fused_kernel, levels=levels, valid_count=n,
                               needs_mask=(padded != n))
    q2d = pl.pallas_call(
        kernel,
        out_shape=jax.ShapeDtypeStruct((rows, LANES), orig_dtype),
        grid_spec=pltpu.PrefetchScalarGridSpec(
            num_scalar_prefetch=0,
            grid=(1,),
            in_specs=[pl.BlockSpec(memory_space=pltpu.SMEM),
                      pl.BlockSpec((rows, LANES), lambda i: (0, 0))],
            out_specs=pl.BlockSpec((rows, LANES), lambda i: (0, 0))),
        compiler_params=pltpu.CompilerParams(
            dimension_semantics=("arbitrary",),
            vmem_limit_bytes=_VMEM_LIMIT),
    )(params, x2d)

    if padded == n:
        return q2d.reshape(orig_shape)
    return q2d.reshape(-1)[:n].reshape(orig_shape)


def _two_pass_forward(flat, alpha_f, levels, n, orig_shape, orig_dtype):
    # Big lane-dense blocks amortise the ~0.35us per-grid-step overhead
    # (important at v7x's ~3.2 TB/s where a 2 MiB block is only ~0.65us).
    if n >= 8 * 1024 * 1024:
        block_rows = 2048                        # 4 MiB f32 per block
    elif n >= 2 * 1024 * 1024:
        block_rows = 1024
    else:
        block_rows = 512

    rows = -(-n // LANES)
    padded = rows * LANES
    if padded != n:
        # TODO(synk): a ragged flat size still costs one pad and one trailing
        # slice traversal (jit-fused); LANES-aligned tensors skip both.
        flat = jnp.pad(flat, (0, padded - n))
    x2d = flat.reshape(rows, LANES)

    # No padding to a block multiple: the last (possibly partial) block is
    # masked in-kernel for the reduce and auto-masked on store for the quant.
    nblocks = -(-rows // block_rows)
    tail_rows = rows - (nblocks - 1) * block_rows
    valid_rows_last = None if tail_rows == block_rows else tail_rows

    # Pass 1: per-block partial per-lane sums -> fully 'parallel' grid (v7x
    # megacore shards it regardless of block-count parity).
    sums, sqs = pl.pallas_call(
        functools.partial(_reduce_kernel, last_idx=nblocks - 1,
                          valid_rows_last=valid_rows_last),
        out_shape=(jax.ShapeDtypeStruct((nblocks, 1, LANES), jnp.float32),
                   jax.ShapeDtypeStruct((nblocks, 1, LANES), jnp.float32)),
        grid_spec=pltpu.PrefetchScalarGridSpec(
            num_scalar_prefetch=0,
            grid=(nblocks,),
            in_specs=[pl.BlockSpec((block_rows, LANES), lambda i: (i, 0))],
            out_specs=(pl.BlockSpec((None, 1, LANES), lambda i: (i, 0, 0)),
                       pl.BlockSpec((None, 1, LANES), lambda i: (i, 0, 0)))),
        compiler_params=pltpu.CompilerParams(
            dimension_semantics=("parallel",),
            vmem_limit_bytes=_VMEM_LIMIT),
    )(x2d)

    # Tiny jit-fused scalar glue (negligible vs two HBM traversals).
    s = jnp.sum(sums)
    sq = jnp.sum(sqs)
    n_f = jnp.float32(n)
    mean = s / n_f
    # E[x^2]-E[x]^2 unbiased variance; clamp so catastrophic cancellation for
    # |mean| >> std can't go negative and produce NaN from rsqrt.
    var = jnp.maximum((sq - s * s / n_f) / (n_f - 1.0), jnp.float32(1e-30))
    inv_std = jax.lax.rsqrt(var)
    scale = inv_std * (levels / alpha_f)
    offset = -(mean * scale)
    scalars = jnp.stack([scale, offset, alpha_f / levels]).astype(jnp.float32)

    # Pass 2: elementwise quantize, fully 'parallel'.
    q2d = pl.pallas_call(
        functools.partial(_quant_kernel, levels=levels),
        out_shape=jax.ShapeDtypeStruct((rows, LANES), orig_dtype),
        grid_spec=pltpu.PrefetchScalarGridSpec(
            num_scalar_prefetch=0,
            grid=(nblocks,),
            in_specs=[pl.BlockSpec(memory_space=pltpu.SMEM),
                      pl.BlockSpec((block_rows, LANES), lambda i: (i, 0))],
            out_specs=pl.BlockSpec((block_rows, LANES), lambda i: (i, 0))),
        compiler_params=pltpu.CompilerParams(
            dimension_semantics=("parallel",),
            vmem_limit_bytes=_VMEM_LIMIT),
    )(scalars, x2d)

    if padded == n:
        return q2d.reshape(orig_shape)
    return q2d.reshape(-1)[:n].reshape(orig_shape)


@functools.partial(jax.jit, static_argnames=("bits", "path"))
def _quantizer_forward_impl(x, alpha, *, bits, path):
    orig_shape = x.shape
    orig_dtype = x.dtype
    n = int(x.size)
    levels = float(2 ** (bits - 1) - 1)          # weight path: 2^(b-1)-1
    alpha_f = jnp.asarray(alpha, jnp.float32)
    flat = x.reshape(-1)                         # keep original dtype

    if path == "fused":
        return _fused_forward(flat, alpha_f, levels, n, orig_shape, orig_dtype)
    return _two_pass_forward(flat, alpha_f, levels, n, orig_shape, orig_dtype)


def quantizer_forward(x, alpha, bits=5):
    """Pallas forward of Quantizer's default config (is_weight=True,
    power=False, use_weight_bias=False, bits > 2)."""
    # TODO(synk): APoT (power=True) projection-set branch and the bits<=2 LSQ
    # branch are not implemented (unreachable with the default constructor).
    path = "fused" if int(x.size) <= _FUSED_MAX_ELEMS else "two_pass"
    return _quantizer_forward_impl(x, alpha, bits=bits, path=path)


# ---------------------------------------------------------------------------
# Reference + checks
# ---------------------------------------------------------------------------
def _reference_forward(x, alpha, bits=5):
    """Pure-JAX reference mirroring the PyTorch forward (same op ordering)."""
    xf = x.astype(jnp.float32)
    mean = jnp.mean(xf)
    std = jnp.std(xf, ddof=1)
    xn = (xf - mean) / std
    levels = float(2 ** (bits - 1) - 1)
    d = jnp.clip(xn / alpha, -1.0, 1.0) * levels
    return (jnp.round(d) / levels * alpha).astype(x.dtype)


def _check(out, ref, x, alpha, bits):
    assert out.shape == x.shape and out.dtype == x.dtype
    step = float(alpha) / float(2 ** (bits - 1) - 1)
    diff = jnp.abs(out.astype(jnp.float32) - ref.astype(jnp.float32))
    exact = diff <= 1e-5
    # Ulp-level differences in reduction order / scalar folding (Pallas vs XLA
    # reference) can flip round() exactly at a .5 boundary; such flips change
    # the output by exactly one quantization step and must be rare.
    one_step = jnp.abs(diff - step) <= 1e-4
    assert bool(jnp.all(exact | one_step)), float(jnp.max(diff))
    assert float(jnp.mean((~exact).astype(jnp.float32))) < 1e-3


if __name__ == "__main__":
    key = jax.random.PRNGKey(0)
    k1, k2, k3 = jax.random.split(key, 3)
    bits = 5
    alpha = jnp.float32(3.0)     # Quantizer.__init__: is_weight=True -> 3.0

    # 1) small conv-weight-sized tensor -> fused single-pass path (aligned).
    x_small = jax.random.normal(k1, (2, 4, 16, 16), dtype=jnp.float32)
    out = jax.block_until_ready(quantizer_forward(x_small, alpha, bits=bits))
    _check(out, _reference_forward(x_small, alpha, bits=bits), x_small, alpha, bits)

    # 2) ragged small tensor -> fused path with in-kernel tail masking.
    x_ragged = jax.random.normal(k2, (3, 3, 7, 5), dtype=jnp.float32)
    out = jax.block_until_ready(quantizer_forward(x_ragged, alpha, bits=bits))
    _check(out, _reference_forward(x_ragged, alpha, bits=bits), x_ragged, alpha, bits)

    # 3) larger activation-sized tensor (ragged size) -> two-pass tiled path
    #    with per-block parallel reduce and a masked partial last block.
    x_big = jax.random.normal(k3, (3, 9, 333, 333), dtype=jnp.float32)
    out = jax.block_until_ready(quantizer_forward(x_big, alpha, bits=bits))
    _check(out, _reference_forward(x_big, alpha, bits=bits), x_big, alpha, bits)

    print("KERNEL_OK")
</pallas_src>

<mosaic_0001>
module attributes {stable_mosaic.version = 11 : i64} {
  func.func @_fused_kernel(%arg0: i32, %arg1: memref<2xf32, #tpu.memory_space<smem>>, %arg2: memref<4x512xf32, #tpu.memory_space<vmem>>, %arg3: memref<4x512xf32, #tpu.memory_space<vmem>>) attributes {dimension_semantics = [#tpu.dimension_semantics<arbitrary>], iteration_bounds = array<i64: 1>, scalar_prefetch = 0 : i64, scratch_operands = 0 : i64, tpu.core_type = #tpu.core_type<tc>, window_params = [{transform_indices = @transform_0, window_bounds = array<i64: 2>}, {pipeline_mode = #tpu.pipeline_mode<synchronous>, transform_indices = @transform_1, window_bounds = array<i64: 4, 512>}, {pipeline_mode = #tpu.pipeline_mode<synchronous>, transform_indices = @transform_2, window_bounds = array<i64: 4, 512>}]} {
    %c0 = arith.constant 0 : index
    %0 = memref.load %arg1[%c0] : memref<2xf32, #tpu.memory_space<smem>>
    %c1 = arith.constant 1 : index
    %1 = memref.load %arg1[%c1] : memref<2xf32, #tpu.memory_space<smem>>
    %c0_0 = arith.constant 0 : index
    %c0_1 = arith.constant 0 : index
    %2 = vector.load %arg2[%c0_0, %c0_1] : memref<4x512xf32, #tpu.memory_space<vmem>>, vector<4x512xf32>
    %cst = arith.constant dense<0.000000e+00> : vector<512xf32>
    %3 = vector.multi_reduction <add>, %2, %cst [0] : vector<4x512xf32> to vector<512xf32>
    %4 = vector.shape_cast %3 : vector<512xf32> to vector<1x512xf32>
    %cst_2 = arith.constant dense<0.000000e+00> : vector<1xf32>
    %5 = vector.multi_reduction <add>, %4, %cst_2 [1] : vector<1x512xf32> to vector<1xf32>
    %6 = vector.shape_cast %5 : vector<1xf32> to vector<1x1xf32>
    %cst_3 = arith.constant 4.8828125E-4 : f32
    %7 = vector.broadcast %cst_3 : f32 to vector<1x1xf32>
    %8 = arith.mulf %6, %7 : vector<1x1xf32>
    %9 = vector.broadcast %8 : vector<1x1xf32> to vector<4x512xf32>
    %10 = arith.subf %2, %9 : vector<4x512xf32>
    %11 = arith.mulf %10, %10 : vector<4x512xf32>
    %cst_4 = arith.constant dense<0.000000e+00> : vector<512xf32>
    %12 = vector.multi_reduction <add>, %11, %cst_4 [0] : vector<4x512xf32> to vector<512xf32>
    %13 = vector.shape_cast %12 : vector<512xf32> to vector<1x512xf32>
    %cst_5 = arith.constant dense<0.000000e+00> : vector<1xf32>
    %14 = vector.multi_reduction <add>, %13, %cst_5 [1] : vector<1x512xf32> to vector<1xf32>
    %15 = vector.shape_cast %14 : vector<1xf32> to vector<1x1xf32>
    %cst_6 = arith.constant 4.88519785E-4 : f32
    %16 = vector.broadcast %cst_6 : f32 to vector<1x1xf32>
    %17 = arith.mulf %15, %16 : vector<1x1xf32>
    %18 = math.rsqrt %17 : vector<1x1xf32>
    %cst_7 = arith.constant 1.500000e+01 : f32
    %19 = arith.mulf %0, %cst_7 : f32
    %20 = vector.broadcast %19 : f32 to vector<1x1xf32>
    %21 = arith.mulf %18, %20 : vector<1x1xf32>
    %22 = arith.mulf %8, %21 : vector<1x1xf32>
    %cst_8 = arith.constant 0.000000e+00 : f32
    %23 = vector.broadcast %cst_8 : f32 to vector<1x1xf32>
    %24 = arith.subf %23, %22 : vector<1x1xf32>
    %25 = vector.broadcast %21 : vector<1x1xf32> to vector<4x512xf32>
    %26 = arith.mulf %2, %25 : vector<4x512xf32>
    %27 = vector.broadcast %24 : vector<1x1xf32> to vector<4x512xf32>
    %28 = arith.addf %26, %27 : vector<4x512xf32>
    %cst_9 = arith.constant -1.500000e+01 : f32
    %cst_10 = arith.constant 1.500000e+01 : f32
    %29 = vector.broadcast %cst_9 : f32 to vector<4x512xf32>
    %30 = arith.maximumf %29, %28 : vector<4x512xf32>
    %31 = vector.broadcast %cst_10 : f32 to vector<4x512xf32>
    %32 = arith.minimumf %31, %30 : vector<4x512xf32>
    %33 = math.roundeven %32 : vector<4x512xf32>
    %34 = vector.broadcast %1 : f32 to vector<4x512xf32>
    %35 = arith.mulf %33, %34 : vector<4x512xf32>
    %c0_11 = arith.constant 0 : index
    %c0_12 = arith.constant 0 : index
    %36 = vector.load %arg3[%c0_11, %c0_12] : memref<4x512xf32, #tpu.memory_space<vmem>>, vector<4x512xf32>
    tpu.vector_store %arg3[%c0_11, %c0_12], %35 {strides = array<i32>} : memref<4x512xf32, #tpu.memory_space<vmem>>, vector<4x512xf32>,
    return
  }
  func.func @transform_0(%arg0: i32) -> i32 {
    %c0_i32 = arith.constant 0 : i32
    %c0_i32_0 = arith.constant 0 : i32
    return %c0_i32 : i32
  }
  func.func @transform_1(%arg0: i32) -> (i32, i32) {
    %c0_i32 = arith.constant 0 : i32
    %c0_i32_0 = arith.constant 0 : i32
    %c0_i32_1 = arith.constant 0 : i32
    return %c0_i32, %c0_i32_0 : i32, i32
  }
  func.func @transform_2(%arg0: i32) -> (i32, i32) {
    %c0_i32 = arith.constant 0 : i32
    %c0_i32_0 = arith.constant 0 : i32
    %c0_i32_1 = arith.constant 0 : i32
    return %c0_i32, %c0_i32_0 : i32, i32
  }
}

</mosaic_0001>

<llo_original>
// kernel: _quantizer_forward_impl.1
$region0: #{_quantizer_forward_impl.1}
  #allocation0 [shape = 'u32[]', space=smem, size = 0x4, offset = 0x4, fixed_abs, tag = 'smem constant byte address 0x4 - core index']
  #allocation1 [shape = 'u32[144,128]{1,0:T(1,128)}', space=vmem, size = 0x12000, scoped, tag = 'internal scratch']
  %s0 = inlined_call_operand.vmem [shape: f32[2], index: 0, kind: input, shape index: {}]
  %s1 = inlined_call_operand.vmem [shape: f32[4,512], index: 1, kind: input, shape index: {}]
  %s2 = inlined_call_operand.vmem [shape: f32[4,512], index: 2, kind: output, shape index: {}]
  %s3 = sld [smem:[#allocation0]]
  $region22: #{_quantizer_forward_impl.1} parent=0
    _
  %s5 = ssub.s32 1, %s3
  %s6 = scalar_select 0, %s5, %s3
  $region1: #{_quantizer_forward_impl.1} parent=0
    #allocation2 [shape = 'u8[512]{0}', space=smem, size = 0x200, scoped, tag = 'input window, operand 0, single buffered']
    #allocation3 [shape = 's32[1]{0}', space=sflag, size = 0x4, scoped, tag = 'scoped memory for _quantizer_forward_impl.1']
    %7 = vsyncpa [#allocation3], 0
    // Predicated region
    $region2: #{_quantizer_forward_impl.1} parent=1 // pred_check
      _
    $region3: #{_quantizer_forward_impl.1} parent=1 // pred_check_branch
      %9 = sbr.rel (0) target = $region5
    $region4: #{_quantizer_forward_impl.1} parent=1 // pred_region
      %s11 = ssub.s32 16, 16
      %12 = vsyncadd [#allocation3], %s11
      %s14 = sshll.u32 %s0, 4
      %s15 = int_to_ptr.vmem [resolvable:$true] %s14
      %17 = dma.vmem_to_smem %s15, 16, [#allocation2], [#allocation3]
    $region5: #{_quantizer_forward_impl.1} parent=1 // pred_fallthru
      _
    // Predicated region
    $region6: #{_quantizer_forward_impl.1} parent=1 // pred_check
      _
    $region7: #{_quantizer_forward_impl.1} parent=1 // pred_check_branch
      %19 = sbr.rel (0) target = $region9
    $region8: #{_quantizer_forward_impl.1} parent=1 // pred_region
      _
    $region9: #{_quantizer_forward_impl.1} parent=1 // pred_fallthru
      _
    // Predicated region
    $region10: #{_quantizer_forward_impl.1} parent=1 // pred_check
      _
    $region11: #{_quantizer_forward_impl.1} parent=1 // pred_check_branch
      %21 = sbr.rel (0) target = $region13
    $region12: #{_quantizer_forward_impl.1} parent=1 // pred_region
      %22 = dma.done [#allocation3], 16
    $region13: #{_quantizer_forward_impl.1} parent=1 // pred_fallthru
      _
    %23 = sfence
    %s24 = sld [smem:[#allocation2]]
    %s25 = sld [smem:[#allocation2 + $0x1]]
    %v26 = vld [vmem:[%s1] sm:$0xff]
    %v27 = vld [vmem:[%s1 + $0x8] sm:$0xff]
    %v30 = vcombine.high %v26, %v26
    %v31 = vcombine.high %v27, %v27
    %vm34 = vcmask 1043456
    %v35 = vsel %vm34, %v26, 0.0
    %v36 = vrot.slane %v35, 4
    %v37 = vadd.f32 %v35, %v36
    %v38 = vrot.slane %v37, 2
    %v39 = vadd.f32 %v37, %v38
    %v40 = vrot.slane %v39, 1
    %v41 = vadd.f32 %v39, %v40
    %v42 = vsel %vm34, %v30, 0.0
    %v43 = vrot.slane %v42, 4
    %v44 = vadd.f32 %v42, %v43
    %v45 = vrot.slane %v44, 2
    %v46 = vadd.f32 %v44, %v45
    %v47 = vrot.slane %v46, 1
    %v48 = vadd.f32 %v46, %v47
    %v49 = vsel %vm34, %v27, 0.0
    %v50 = vrot.slane %v49, 4
    %v51 = vadd.f32 %v49, %v50
    %v52 = vrot.slane %v51, 2
    %v53 = vadd.f32 %v51, %v52
    %v54 = vrot.slane %v53, 1
    %v55 = vadd.f32 %v53, %v54
    %v56 = vsel %vm34, %v31, 0.0
    %v57 = vrot.slane %v56, 4
    %v58 = vadd.f32 %v56, %v57
    %v59 = vrot.slane %v58, 2
    %v60 = vadd.f32 %v58, %v59
    %v61 = vrot.slane %v60, 1
    %v62 = vadd.f32 %v60, %v61
    %v63 = vadd.f32 %v41, %v48
    %v64 = vadd.f32 %v63, %v55
    %v65 = vadd.f32 %v64, %v62
    %66 = vadd.xlane.f32.xlu0 %v65
    %v67 = vpop.xlane.xlu0 %66
    %v68 = vmul.f32 %v67, 0.00048828125
    %v69 = vsub.f32 %v26, %v68
    %v70 = vsub.f32 %v27, %v68
    %v71 = vmul.f32 %v69, %v69
    %v72 = vmul.f32 %v70, %v70
    %v75 = vcombine.high %v71, %v71
    %v76 = vcombine.high %v72, %v72
    %v79 = vsel %vm34, %v71, 0.0
    %v80 = vrot.slane %v79, 4
    %v81 = vadd.f32 %v79, %v80
    %v82 = vrot.slane %v81, 2
    %v83 = vadd.f32 %v81, %v82
    %v84 = vrot.slane %v83, 1
    %v85 = vadd.f32 %v83, %v84
    %v86 = vsel %vm34, %v75, 0.0
    %v87 = vrot.slane %v86, 4
    %v88 = vadd.f32 %v86, %v87
    %v89 = vrot.slane %v88, 2
    %v90 = vadd.f32 %v88, %v89
    %v91 = vrot.slane %v90, 1
    %v92 = vadd.f32 %v90, %v91
    %v93 = vsel %vm34, %v72, 0.0
    %v94 = vrot.slane %v93, 4
    %v95 = vadd.f32 %v93, %v94
    %v96 = vrot.slane %v95, 2
    %v97 = vadd.f32 %v95, %v96
    %v98 = vrot.slane %v97, 1
    %v99 = vadd.f32 %v97, %v98
    %v100 = vsel %vm34, %v76, 0.0
    %v101 = vrot.slane %v100, 4
    %v102 = vadd.f32 %v100, %v101
    %v103 = vrot.slane %v102, 2
    %v104 = vadd.f32 %v102, %v103
    %v105 = vrot.slane %v104, 1
    %v106 = vadd.f32 %v104, %v105
    %v107 = vadd.f32 %v85, %v92
    %v108 = vadd.f32 %v107, %v99
    %v109 = vadd.f32 %v108, %v106
    %110 = vadd.xlane.f32.xlu0 %v109
    %v111 = vpop.xlane.xlu0 %110
    %v112 = vmul.f32 %v111, 0.0004885198
    %v113 = vrsqrt.pop %v112
    %s114 = smul.f32 %s24, 15.0
    %v115 = vstv %s114
    %v116 = vmul.f32 %v113, %v115
    %v117 = vmul.f32 %v68, %v116
    %v118 = vsub.f32 0.0, %v117
    %v119 = vmul.f32 %v26, %v116
    %v120 = vmul.f32 %v27, %v116
    %v121 = vadd.f32 %v119, %v118
    %v122 = vadd.f32 %v120, %v118
    %v123 = vmax.f32 %v121, -15.0
    %v124 = vmax.f32 %v122, -15.0
    %v125 = vmin.f32 %v123, 15.0
    %v126 = vmin.f32 %v124, 15.0
    %v127 = vround.ne.pseudo %v125
    %v128 = vround.ne.pseudo %v126
    %v129 = vstv %s25
    %v130 = vmul.f32 %v127, %v129
    %v131 = vmul.f32 %v128, %v129
    %132 = vst [vmem:[%s2] sm:$0xff] %v130
    %133 = vst [vmem:[%s2 + $0x8] sm:$0xff] %v131
    // Predicated region
    $region14: #{_quantizer_forward_impl.1} parent=1 // pred_check
      _
    $region15: #{_quantizer_forward_impl.1} parent=1 // pred_check_branch
      %135 = sbr.rel (0) target = $region17
    $region16: #{_quantizer_forward_impl.1} parent=1 // pred_region
      _
    $region17: #{_quantizer_forward_impl.1} parent=1 // pred_fallthru
      _
    // Predicated region
    $region18: #{_quantizer_forward_impl.1} parent=1 // pred_check
      _
    $region19: #{_quantizer_forward_impl.1} parent=1 // pred_check_branch
      %137 = sbr.rel (0) target = $region21
    $region20: #{_quantizer_forward_impl.1} parent=1 // pred_region
      _
    $region21: #{_quantizer_forward_impl.1} parent=1 // pred_fallthru
      _
    %138 = vsyncpa [#allocation3], 1

</llo_original>
